<compile_context>
chip_gen: v7x
topology: tpu7x:2x2x1
jax: 0.10.0
libtpu: 0.0.40
codegen_flags: <defaults>
</compile_context>

<pallas_src>
import math

import jax
import jax.numpy as jnp
from jax.experimental import pallas as pl
from jax.experimental.pallas import tpu as pltpu

BN_EPS = 1e-5  # nn.BatchNorm2d default


def _round_up(x, m):
    return (x + m - 1) // m * m


def _conv_stats_kernel(p_ref, w_ref, y_ref, psum_ref, pssq_ref):
    """One M-tile: y = patches @ w (bf16 operands, f32 MXU accumulation).

    Writes y downcast to bf16 and per-tile partial per-channel sum /
    sum-of-squares (taken from the f32 result before the downcast).
    """
    y = jnp.dot(p_ref[...], w_ref[...], preferred_element_type=jnp.float32)
    y_ref[...] = y.astype(y_ref.dtype)
    psum_ref[...] = jnp.sum(y, axis=0, keepdims=True)[None]
    pssq_ref[...] = jnp.sum(y * y, axis=0, keepdims=True)[None]


def overlap_patch_embed(x_nchw, weight, bias, gamma, beta, *,
                        patch_size=7, stride=4, tile_m=4096):
    """Equivalent of OverlapPatchEmbed.forward: returns (out_nchw, H_out, W_out)."""
    del bias  # cancels exactly under training-mode BatchNorm (mean subtraction)

    pad = patch_size // 2
    N, Cin, H, W = x_nchw.shape
    Cout = weight.shape[0]

    # ---- glue: NCHW -> NHWC (bf16), spatial pad, im2col (kh, kw, Cin order) ----
    x = jnp.transpose(x_nchw, (0, 2, 3, 1)).astype(jnp.bfloat16)
    x = jnp.pad(x, ((0, 0), (pad, pad), (pad, pad), (0, 0)))
    Hp, Wp = H + 2 * pad, W + 2 * pad
    Ho = (Hp - patch_size) // stride + 1
    Wo = (Wp - patch_size) // stride + 1

    cols = []
    for kh in range(patch_size):
        rows = []
        for kw in range(patch_size):
            rows.append(
                x[:, kh:kh + stride * Ho:stride, kw:kw + stride * Wo:stride, :]
            )
        cols.append(jnp.stack(rows, axis=3))            # (N, Ho, Wo, kw, Cin)
    patches = jnp.stack(cols, axis=3)                   # (N, Ho, Wo, kh, kw, Cin)

    M = N * Ho * Wo
    K = patch_size * patch_size * Cin                   # 147 for 7x7x3: NOT padded
    C_pad = _round_up(Cout, 128)
    TM = tile_m if M >= tile_m else _round_up(M, 16)    # bf16 sublane multiple
    M_pad = _round_up(M, TM)
    n_tiles = M_pad // TM

    patches = patches.reshape(M, K)                     # bf16, one materialization
    if M_pad != M:
        patches = jnp.pad(patches, ((0, M_pad - M), (0, 0)))

    # PyTorch conv weight (Cout, Cin, kh, kw) -> (kh, kw, Cin, Cout) -> (K, Cout)
    w_mat = jnp.transpose(weight, (2, 3, 1, 0)).reshape(K, Cout).astype(jnp.bfloat16)
    w_mat = jnp.pad(w_mat, ((0, 0), (0, C_pad - Cout)))

    # ---- Pallas: conv-as-matmul + per-tile BN partial statistics ----
    y, psum, pssq = pl.pallas_call(
        _conv_stats_kernel,
        out_shape=(jax.ShapeDtypeStruct((M_pad, C_pad), jnp.bfloat16),
                   jax.ShapeDtypeStruct((n_tiles, 1, C_pad), jnp.float32),
                   jax.ShapeDtypeStruct((n_tiles, 1, C_pad), jnp.float32)),
        grid_spec=pltpu.PrefetchScalarGridSpec(
            num_scalar_prefetch=0,
            grid=(n_tiles,),
            in_specs=[
                pl.BlockSpec((TM, K), lambda i: (i, 0)),      # patch tile (K unpadded)
                pl.BlockSpec((K, C_pad), lambda i: (0, 0)),   # weight, resident
            ],
            out_specs=[
                pl.BlockSpec((TM, C_pad), lambda i: (i, 0)),        # y (bf16)
                pl.BlockSpec((1, 1, C_pad), lambda i: (i, 0, 0)),   # partial sum
                pl.BlockSpec((1, 1, C_pad), lambda i: (i, 0, 0)),   # partial sum sq
            ],
        ),
        compiler_params=pltpu.CompilerParams(
            dimension_semantics=("parallel",),   # per-tile partials -> megacore OK
            vmem_limit_bytes=32 * 1024 * 1024),
    )(patches, w_mat)

    # ---- fold global stats + gamma/beta into per-channel (scale, shift) ----
    # (zero-padded rows contribute 0 to both sums; divide by the real M)
    tot = jnp.sum(psum.reshape(n_tiles, C_pad), axis=0)[:Cout]
    tot2 = jnp.sum(pssq.reshape(n_tiles, C_pad), axis=0)[:Cout]
    inv_m = 1.0 / float(M)
    mean = tot * inv_m
    var = jnp.maximum(tot2 * inv_m - mean * mean, 0.0)
    scale = gamma.astype(jnp.float32) * jax.lax.rsqrt(var + BN_EPS)
    shift = beta.astype(jnp.float32) - mean * scale

    # ---- epilogue: FMA fused by XLA with the NCHW transpose (single pass) ----
    out = y[:M, :Cout].astype(jnp.float32) * scale[None, :] + shift[None, :]
    out_nchw = out.reshape(N, Ho, Wo, Cout).transpose(0, 3, 1, 2)
    return out_nchw, Ho, Wo


if __name__ == "__main__":
    key = jax.random.PRNGKey(0)
    N, Cin, H, W = 2, 3, 16, 16
    Cout = 32
    patch_size, stride = 7, 4

    k_x, k_w = jax.random.split(key)
    x = jax.random.normal(k_x, (N, Cin, H, W), dtype=jnp.float32)

    # Parameter init mirroring OverlapPatchEmbed._init_weights:
    # conv weight ~ N(0, sqrt(2/fan_out)), fan_out = k*k*Cout; conv bias = 0;
    # BatchNorm2d default: gamma = 1, beta = 0.
    fan_out = patch_size * patch_size * Cout
    weight = jax.random.normal(
        k_w, (Cout, Cin, patch_size, patch_size), dtype=jnp.float32
    ) * math.sqrt(2.0 / fan_out)
    bias = jnp.zeros((Cout,), jnp.float32)
    gamma = jnp.ones((Cout,), jnp.float32)
    beta = jnp.zeros((Cout,), jnp.float32)

    out, Ho, Wo = overlap_patch_embed(
        x, weight, bias, gamma, beta, patch_size=patch_size, stride=stride
    )
    out = jax.block_until_ready(out)

    # Pure-JAX reference.  Mirror the kernel's numerics: bf16-rounded conv
    # operands with f32 accumulation, stats from the f32 conv output, then the
    # normalization applied to the bf16-rounded conv output.
    xq = x.astype(jnp.bfloat16).astype(jnp.float32)
    wq = weight.astype(jnp.bfloat16).astype(jnp.float32)
    y_ref = jax.lax.conv_general_dilated(
        xq, wq, window_strides=(stride, stride),
        padding=[(patch_size // 2, patch_size // 2)] * 2,
        dimension_numbers=("NCHW", "OIHW", "NCHW"),
    ) + bias.reshape(1, Cout, 1, 1)
    mean = jnp.mean(y_ref, axis=(0, 2, 3), keepdims=True)
    var = jnp.mean(jnp.square(y_ref - mean), axis=(0, 2, 3), keepdims=True)
    scale_ref = gamma.reshape(1, Cout, 1, 1) * jax.lax.rsqrt(var + BN_EPS)
    shift_ref = beta.reshape(1, Cout, 1, 1) - mean * scale_ref
    y_q = y_ref.astype(jnp.bfloat16).astype(jnp.float32)   # kernel stores y in bf16
    out_ref = y_q * scale_ref + shift_ref

    assert out.shape == out_ref.shape == (N, Cout, Ho, Wo)
    assert jnp.allclose(out, out_ref, atol=5e-3, rtol=5e-3)
    print("KERNEL_OK")
</pallas_src>

<mosaic_0001>
module attributes {stable_mosaic.version = 11 : i64} {
  func.func @_conv_stats_kernel(%arg0: i32, %arg1: memref<32x147xbf16, #tpu.memory_space<vmem>>, %arg2: memref<147x128xbf16, #tpu.memory_space<vmem>>, %arg3: memref<32x128xbf16, #tpu.memory_space<vmem>>, %arg4: memref<1x1x128xf32, #tpu.memory_space<vmem>>, %arg5: memref<1x1x128xf32, #tpu.memory_space<vmem>>) attributes {dimension_semantics = [#tpu.dimension_semantics<parallel>], iteration_bounds = array<i64: 1>, scalar_prefetch = 0 : i64, scratch_operands = 0 : i64, tpu.core_type = #tpu.core_type<tc>, window_params = [{transform_indices = @transform_0, window_bounds = array<i64: 32, 147>}, {pipeline_mode = #tpu.pipeline_mode<synchronous>, transform_indices = @transform_1, window_bounds = array<i64: 147, 128>}, {transform_indices = @transform_2, window_bounds = array<i64: 32, 128>}, {transform_indices = @transform_3, window_bounds = array<i64: 1, 1, 128>}, {transform_indices = @transform_4, window_bounds = array<i64: 1, 1, 128>}]} {
    %c0 = arith.constant 0 : index
    %c0_0 = arith.constant 0 : index
    %0 = vector.load %arg1[%c0, %c0_0] : memref<32x147xbf16, #tpu.memory_space<vmem>>, vector<32x147xbf16>
    %c0_1 = arith.constant 0 : index
    %c0_2 = arith.constant 0 : index
    %1 = vector.load %arg2[%c0_1, %c0_2] : memref<147x128xbf16, #tpu.memory_space<vmem>>, vector<147x128xbf16>
    %cst = arith.constant dense<0.000000e+00> : vector<32x128xf32>
    %2 = tpu.matmul %0, %1, %cst {dimension_numbers = #tpu.dot_dimension_numbers<[1], [0], [0], [1], [0, 0, 1, 1], [], []>} : vector<32x147xbf16>, vector<147x128xbf16>, vector<32x128xf32> -> vector<32x128xf32>
    %3 = arith.truncf %2 : vector<32x128xf32> to vector<32x128xbf16>
    %c0_3 = arith.constant 0 : index
    %c0_4 = arith.constant 0 : index
    %4 = vector.load %arg3[%c0_3, %c0_4] : memref<32x128xbf16, #tpu.memory_space<vmem>>, vector<32x128xbf16>
    tpu.vector_store %arg3[%c0_3, %c0_4], %3 {strides = array<i32>} : memref<32x128xbf16, #tpu.memory_space<vmem>>, vector<32x128xbf16>,
    %cst_5 = arith.constant dense<0.000000e+00> : vector<128xf32>
    %5 = vector.multi_reduction <add>, %2, %cst_5 [0] : vector<32x128xf32> to vector<128xf32>
    %6 = vector.shape_cast %5 : vector<128xf32> to vector<1x128xf32>
    %7 = vector.shape_cast %6 : vector<1x128xf32> to vector<1x1x128xf32>
    %c0_6 = arith.constant 0 : index
    %c0_7 = arith.constant 0 : index
    %c0_8 = arith.constant 0 : index
    %8 = vector.load %arg4[%c0_6, %c0_7, %c0_8] : memref<1x1x128xf32, #tpu.memory_space<vmem>>, vector<1x1x128xf32>
    tpu.vector_store %arg4[%c0_6, %c0_7, %c0_8], %7 {strides = array<i32>} : memref<1x1x128xf32, #tpu.memory_space<vmem>>, vector<1x1x128xf32>,
    %9 = arith.mulf %2, %2 : vector<32x128xf32>
    %cst_9 = arith.constant dense<0.000000e+00> : vector<128xf32>
    %10 = vector.multi_reduction <add>, %9, %cst_9 [0] : vector<32x128xf32> to vector<128xf32>
    %11 = vector.shape_cast %10 : vector<128xf32> to vector<1x128xf32>
    %12 = vector.shape_cast %11 : vector<1x128xf32> to vector<1x1x128xf32>
    %c0_10 = arith.constant 0 : index
    %c0_11 = arith.constant 0 : index
    %c0_12 = arith.constant 0 : index
    %13 = vector.load %arg5[%c0_10, %c0_11, %c0_12] : memref<1x1x128xf32, #tpu.memory_space<vmem>>, vector<1x1x128xf32>
    tpu.vector_store %arg5[%c0_10, %c0_11, %c0_12], %12 {strides = array<i32>} : memref<1x1x128xf32, #tpu.memory_space<vmem>>, vector<1x1x128xf32>,
    return
  }
  func.func @transform_0(%arg0: i32) -> (i32, i32) {
    %c0_i32 = arith.constant 0 : i32
    %c0_i32_0 = arith.constant 0 : i32
    return %arg0, %c0_i32 : i32, i32
  }
  func.func @transform_1(%arg0: i32) -> (i32, i32) {
    %c0_i32 = arith.constant 0 : i32
    %c0_i32_0 = arith.constant 0 : i32
    %c0_i32_1 = arith.constant 0 : i32
    return %c0_i32, %c0_i32_0 : i32, i32
  }
  func.func @transform_2(%arg0: i32) -> (i32, i32) {
    %c0_i32 = arith.constant 0 : i32
    %c0_i32_0 = arith.constant 0 : i32
    return %arg0, %c0_i32 : i32, i32
  }
  func.func @transform_3(%arg0: i32) -> (i32, i32, i32) {
    %c0_i32 = arith.constant 0 : i32
    %c0_i32_0 = arith.constant 0 : i32
    %c0_i32_1 = arith.constant 0 : i32
    return %arg0, %c0_i32, %c0_i32_0 : i32, i32, i32
  }
  func.func @transform_4(%arg0: i32) -> (i32, i32, i32) {
    %c0_i32 = arith.constant 0 : i32
    %c0_i32_0 = arith.constant 0 : i32
    %c0_i32_1 = arith.constant 0 : i32
    return %arg0, %c0_i32, %c0_i32_0 : i32, i32, i32
  }
}

</mosaic_0001>

<llo_original>
// kernel: tpu_custom_call.1
$region0: #{tpu_custom_call.1}
  #allocation0 [shape = 'u32[]', space=smem, size = 0x4, offset = 0x4, fixed_abs, tag = 'smem constant byte address 0x4 - core index']
  #allocation1 [shape = 'u32[144,128]{1,0:T(1,128)}', space=vmem, size = 0x12000, scoped, tag = 'internal scratch']
  %s0 = inlined_call_operand.hbm [shape: bf16[32,147], index: 0, kind: input, shape index: {}]
  %s1 = inlined_call_operand.hbm [shape: bf16[147,128], index: 1, kind: input, shape index: {}]
  %s2 = inlined_call_operand.hbm [shape: bf16[32,128], index: 2, kind: output, shape index: {0}]
  %s3 = inlined_call_operand.hbm [shape: f32[1,1,128], index: 3, kind: output, shape index: {1}]
  %s4 = inlined_call_operand.hbm [shape: f32[1,1,128], index: 4, kind: output, shape index: {2}]
  %5 = xla_tuple %s2, %s3, %s4
  %s6 = sld [smem:[#allocation0]]
  $region42: #{tpu_custom_call.1} parent=0
    _
  %s8 = ssub.s32 1, %s6
  %s9 = scalar_select 0, %s8, %s6
  $region1: #{tpu_custom_call.1} parent=0
    #allocation2 [shape = 'u8[16384]{0}', space=vmem, size = 0x4000, scoped, tag = 'input window, operand 0, single buffered']
    #allocation3 [shape = 's32[1]{0}', space=sflag, size = 0x4, scoped, tag = 'scoped memory for tpu_custom_call.1']
    #allocation4 [shape = 's32[1]{0}', space=sflag, size = 0x4, scoped, tag = 'scoped memory for tpu_custom_call.1']
    #allocation5 [shape = 'u8[38912]{0}', space=vmem, size = 0x9800, scoped, tag = 'input window, operand 1, single buffered']
    #allocation6 [shape = 's32[1]{0}', space=sflag, size = 0x4, scoped, tag = 'scoped memory for tpu_custom_call.1']
    #allocation7 [shape = 'u8[8192]{0}', space=vmem, size = 0x2000, scoped, tag = 'output window, operand 0, single buffered']
    #allocation8 [shape = 'u8[512]{0}', space=vmem, size = 0x400, scoped, tag = 'output window, operand 1, single buffered']
    #allocation9 [shape = 's32[1]{0}', space=sflag, size = 0x4, scoped, tag = 'scoped memory for tpu_custom_call.1']
    #allocation10 [shape = 'u8[512]{0}', space=vmem, size = 0x400, scoped, tag = 'output window, operand 2, single buffered']
    %10 = vsyncpa [#allocation3], 0
    %11 = vsyncpa [#allocation6], 0
    %12 = vsyncpa [#allocation4], 0
    %13 = vsyncpa [#allocation9], 0
    // Predicated region
    $region2: #{tpu_custom_call.1} parent=1 // pred_check
      _
    $region3: #{tpu_custom_call.1} parent=1 // pred_check_branch
      %15 = sbr.rel (0) target = $region5
    $region4: #{tpu_custom_call.1} parent=1 // pred_region
      %s17 = ssub.s32 512, 512
      %18 = vsyncadd [#allocation3], %s17
      %s19 = sshll.u32 [#allocation2], 4
      %s20 = int_to_ptr.vmem [resolvable:$true] %s19
      %25 = dma.hbm_to_vmem [thread:$0]  %s0, 512, %s20, [#allocation3], 128, 128, 8
    $region5: #{tpu_custom_call.1} parent=1 // pred_fallthru
      _
    // Predicated region
    $region6: #{tpu_custom_call.1} parent=1 // pred_check
      _
    $region7: #{tpu_custom_call.1} parent=1 // pred_check_branch
      %27 = sbr.rel (0) target = $region9
    $region8: #{tpu_custom_call.1} parent=1 // pred_region
      %s29 = ssub.s32 1216, 1216
      %30 = vsyncadd [#allocation6], %s29
      %s31 = sshll.u32 [#allocation5], 4
      %s32 = int_to_ptr.vmem [resolvable:$true] %s31
      %37 = dma.hbm_to_vmem [thread:$0]  %s1, 1216, %s32, [#allocation6], 64, 64, 4
    $region9: #{tpu_custom_call.1} parent=1 // pred_fallthru
      _
    // Predicated region
    $region10: #{tpu_custom_call.1} parent=1 // pred_check
      _
    $region11: #{tpu_custom_call.1} parent=1 // pred_check_branch
      %39 = sbr.rel (0) target = $region13
    $region12: #{tpu_custom_call.1} parent=1 // pred_region
      %40 = dma.done [#allocation3], 512
    $region13: #{tpu_custom_call.1} parent=1 // pred_fallthru
      _
    // Predicated region
    $region14: #{tpu_custom_call.1} parent=1 // pred_check
      _
    $region15: #{tpu_custom_call.1} parent=1 // pred_check_branch
      %42 = sbr.rel (0) target = $region17
    $region16: #{tpu_custom_call.1} parent=1 // pred_region
      %43 = dma.done [#allocation6], 1216
    $region17: #{tpu_custom_call.1} parent=1 // pred_fallthru
      _
    %v45 = vld [vmem:[#allocation2] sm:$0xff]
    %v46 = vld [vmem:[#allocation2 + $0x8] sm:$0xff]
    %v47 = vld [vmem:[#allocation2 + $0x10] sm:$0xff]
    %v48 = vld [vmem:[#allocation2 + $0x18] sm:$0xff]
    %v49 = vld [vmem:[#allocation5] sm:$0xf]
    %v50 = vld [vmem:[#allocation5 + $0x4] sm:$0xf]
    %v51 = vld [vmem:[#allocation5 + $0x8] sm:$0xf]
    %v52 = vld [vmem:[#allocation5 + $0xc] sm:$0xf]
    %v53 = vld [vmem:[#allocation5 + $0x10] sm:$0xf]
    %v54 = vld [vmem:[#allocation5 + $0x14] sm:$0xf]
    %v55 = vld [vmem:[#allocation5 + $0x18] sm:$0xf]
    %v56 = vld [vmem:[#allocation5 + $0x1c] sm:$0xf]
    %v57 = vld [vmem:[#allocation5 + $0x20] sm:$0xf]
    %v58 = vld [vmem:[#allocation5 + $0x24] sm:$0xf]
    %v59 = vld [vmem:[#allocation5 + $0x28] sm:$0xf]
    %v60 = vld [vmem:[#allocation5 + $0x2c] sm:$0xf]
    %v61 = vld [vmem:[#allocation5 + $0x30] sm:$0xf]
    %v62 = vld [vmem:[#allocation5 + $0x34] sm:$0xf]
    %v63 = vld [vmem:[#allocation5 + $0x38] sm:$0xf]
    %v64 = vld [vmem:[#allocation5 + $0x3c] sm:$0xf]
    %v65 = vld [vmem:[#allocation5 + $0x40] sm:$0xf]
    %v66 = vld [vmem:[#allocation5 + $0x44] sm:$0xf]
    %v67 = vld [vmem:[#allocation5 + $0x48] sm:$0x3]
    %v72 = vunpack.c.l.b16 %v45
    %v73 = vunpack.c.h.b16 %v45
    %v74 = vunpack.c.l.b16 %v46
    %v75 = vunpack.c.h.b16 %v46
    %v76 = vunpack.c.l.b16 %v47
    %v77 = vunpack.c.h.b16 %v47
    %v78 = vunpack.c.l.b16 %v48
    %v79 = vunpack.c.h.b16 %v48
    %v80 = vpack.c.b16 %v74, %v72
    %v81 = vpack.c.b16 %v75, %v73
    %v82 = vpack.c.b16 %v78, %v76
    %v83 = vpack.c.b16 %v79, %v77
    %v105 = vunpack.c.l.b16 %v49
    %v106 = vunpack.c.l.b16 %v50
    %v107 = vunpack.c.l.b16 %v51
    %v108 = vunpack.c.l.b16 %v52
    %v109 = vunpack.c.l.b16 %v53
    %v110 = vunpack.c.l.b16 %v54
    %v111 = vunpack.c.l.b16 %v55
    %v112 = vunpack.c.l.b16 %v56
    %v113 = vunpack.c.l.b16 %v57
    %v114 = vunpack.c.l.b16 %v58
    %v115 = vunpack.c.l.b16 %v59
    %v116 = vunpack.c.l.b16 %v60
    %v117 = vunpack.c.l.b16 %v61
    %v118 = vunpack.c.l.b16 %v62
    %v119 = vunpack.c.l.b16 %v63
    %v120 = vunpack.c.l.b16 %v64
    %v121 = vunpack.c.l.b16 %v65
    %v122 = vunpack.c.l.b16 %v66
    %v123 = vunpack.c.l.b16 %v67
    %v124 = vpack.c.b16 %v106, %v105
    %v125 = vpack.c.b16 %v108, %v107
    %v126 = vpack.c.b16 %v110, %v109
    %v127 = vpack.c.b16 %v112, %v111
    %v128 = vpack.c.b16 %v114, %v113
    %v129 = vpack.c.b16 %v116, %v115
    %v130 = vpack.c.b16 %v118, %v117
    %v131 = vpack.c.b16 %v120, %v119
    %v132 = vpack.c.b16 %v122, %v121
    %v133 = vpack.c.b16 %v123, %v123
    %vm143 = vcmask 154624
    %v145 = vsel %vm143, %v81, 0
    %v148 = vsel %vm143, %v83, 0
    %vm150 = vcmask 1040384
    %vm151 = vcmask 1041408
    %v152 = vsel %vm150, 4294967295, 65535
    %v153 = vsel %vm151, %v152, 0
    %v155 = vand.u32 %v133, %v153
    %157 = vmatprep.subr.bf16.mxu0 0
    %158 = vmatpush1.bf16.msra.mxu0 %v124
    %159 = vmatprep.subr.bf16.mxu0 0
    %160 = vmatpush1.bf16.msra.mxu0 %v125
    %161 = vmatprep.subr.bf16.mxu0 0
    %162 = vmatpush1.bf16.msra.mxu0 %v126
    %163 = vmatprep.subr.bf16.mxu0 0
    %164 = vmatpush1.bf16.msra.mxu0 %v127
    %165 = vmatprep.subr.bf16.mxu0 0
    %166 = vmatpush1.bf16.msra.mxu0 %v128
    %167 = vmatprep.subr.bf16.mxu0 0
    %168 = vmatpush1.bf16.msra.mxu0 %v129
    %169 = vmatprep.subr.bf16.mxu0 0
    %170 = vmatpush1.bf16.msra.mxu0 %v130
    %171 = vmatprep.subr.bf16.mxu0 0
    %172 = vmatpush1.bf16.msra.mxu0 %v131
    %173 = vmatprep.subr.bf16.mxu0 0
    %174 = vmatpush1.bf16.msra.mxu0 %v132
    %175 = vmatprep.subr.bf16.mxu0 0
    %176 = vmatpush1.bf16.msra.mxu0 %v155
    %177 = vmatprep.subr.bf16.mxu0 0
    %178 = vmatpush1.bf16.msra.mxu0 0
    %179 = vmatprep.subr.bf16.mxu0 0
    %180 = vmatpush1.bf16.msra.mxu0 0
    %181 = vmatprep.subr.bf16.mxu0 0
    %182 = vmatpush1.bf16.msra.mxu0 0
    %183 = vmatprep.subr.bf16.mxu0 0
    %184 = vmatpush1.bf16.msra.mxu0 0
    %185 = vmatprep.subr.bf16.mxu0 0
    %186 = vmatpush1.bf16.msra.mxu0 0
    %187 = vmatprep.subr.bf16.mxu0 0
    %188 = vmatpush1.bf16.msra.mxu0 0
    %189 = vmatprep.mubr.bf16.mxu0 %v145
    %190 = vmatmul.mubr.bf16.gmra.mrb[0].mxu0 %v80
    %v191 = vpop.f32.mrb[0].mxu0
    %v192 = vadd.f32 0.0, %v191
    %v193 = vpop.f32.mrb[0].mxu0
    %v194 = vpop.f32.mrb[0].mxu0
    %v195 = vadd.f32 0.0, %v194
    %v196 = vpop.f32.mrb[0].mxu0
    %197 = vmatprep.mubr.bf16.mxu0 %v148
    %198 = vmatmul.mubr.bf16.gmra.mrb[0].mxu0 %v82
    %v199 = vpop.f32.mrb[0].mxu0
    %v200 = vadd.f32 0.0, %v199
    %v201 = vpop.f32.mrb[0].mxu0
    %v202 = vpop.f32.mrb[0].mxu0
    %v203 = vadd.f32 0.0, %v202
    %v204 = vpop.f32.mrb[0].mxu0
    %205 = vdwg.mxu0
    %v206 = vpack.c.bf16 %v195, %v192
    %v207 = vpack.c.bf16 %v203, %v200
    %v210 = vunpack.c.l.b16 %v206
    %v211 = vunpack.c.h.b16 %v206
    %v212 = vunpack.c.l.b16 %v207
    %v213 = vunpack.c.h.b16 %v207
    %v214 = vpack.c.b16 %v210, %v210
    %v215 = vpack.c.b16 %v211, %v211
    %v216 = vpack.c.b16 %v212, %v212
    %v217 = vpack.c.b16 %v213, %v213
    %222 = vst [vmem:[#allocation7] sm:$0xf] %v214
    %223 = vst [vmem:[#allocation7 + $0x4] sm:$0xf] %v215
    %224 = vst [vmem:[#allocation7 + $0x8] sm:$0xf] %v216
    %225 = vst [vmem:[#allocation7 + $0xc] sm:$0xf] %v217
    %v226 = vadd.f32 %v192, %v195
    %v227 = vadd.f32 %v226, %v200
    %v228 = vadd.f32 %v227, %v203
    %v229 = vrot.slane %v228, 4
    %v230 = vadd.f32 %v228, %v229
    %v231 = vrot.slane %v230, 2
    %v232 = vadd.f32 %v230, %v231
    %v233 = vrot.slane %v232, 1
    %v234 = vadd.f32 %v232, %v233
    %235 = vst [vmem:[#allocation8] sm:$0x1] %v234
    %v236 = vmul.f32 %v192, %v192
    %v237 = vmul.f32 %v195, %v195
    %v238 = vmul.f32 %v200, %v200
    %v239 = vmul.f32 %v203, %v203
    %v240 = vadd.f32 %v236, %v237
    %v241 = vadd.f32 %v240, %v238
    %v242 = vadd.f32 %v241, %v239
    %v243 = vrot.slane %v242, 4
    %v244 = vadd.f32 %v242, %v243
    %v245 = vrot.slane %v244, 2
    %v246 = vadd.f32 %v244, %v245
    %v247 = vrot.slane %v246, 1
    %v248 = vadd.f32 %v246, %v247
    %249 = vst [vmem:[#allocation10] sm:$0x1] %v248
    // Predicated region
    $region18: #{tpu_custom_call.1} parent=1 // pred_check
      _
    $region19: #{tpu_custom_call.1} parent=1 // pred_check_branch
      %251 = sbr.rel (0) target = $region21
    $region20: #{tpu_custom_call.1} parent=1 // pred_region
      %s253 = ssub.s32 256, 256
      %254 = vsyncadd [#allocation4], %s253
      %s255 = sshll.u32 [#allocation7], 4
      %s256 = int_to_ptr.vmem [resolvable:$true] %s255
      %261 = dma.vmem_to_hbm [thread:$0]  %s256, 256, %s2, [#allocation4], 64, 64, 4
    $region21: #{tpu_custom_call.1} parent=1 // pred_fallthru
      _
    // Predicated region
    $region22: #{tpu_custom_call.1} parent=1 // pred_check
      _
    $region23: #{tpu_custom_call.1} parent=1 // pred_check_branch
      %263 = sbr.rel (0) target = $region25
    $region24: #{tpu_custom_call.1} parent=1 // pred_region
      %s265 = ssub.s32 16, 16
      %266 = vsyncadd [#allocation9], %s265
      %s268 = sshll.u32 [#allocation8], 4
      %s269 = int_to_ptr.vmem [resolvable:$true] %s268
      %271 = dma.vmem_to_hbm [thread:$0]  %s269, 16, %s3, [#allocation9]
    $region25: #{tpu_custom_call.1} parent=1 // pred_fallthru
      _
    // Predicated region
    $region26: #{tpu_custom_call.1} parent=1 // pred_check
      _
    $region27: #{tpu_custom_call.1} parent=1 // pred_check_branch
      %273 = sbr.rel (0) target = $region29
    $region28: #{tpu_custom_call.1} parent=1 // pred_region
      %s275 = ssub.s32 16, 16
      %276 = vsyncadd [#allocation9], %s275
      %s278 = sshll.u32 [#allocation10], 4
      %s279 = int_to_ptr.vmem [resolvable:$true] %s278
      %281 = dma.vmem_to_hbm [thread:$0]  %s279, 16, %s4, [#allocation9]
    $region29: #{tpu_custom_call.1} parent=1 // pred_fallthru
      _
    // Predicated region
    $region30: #{tpu_custom_call.1} parent=1 // pred_check
      _
    $region31: #{tpu_custom_call.1} parent=1 // pred_check_branch
      %283 = sbr.rel (0) target = $region33
    $region32: #{tpu_custom_call.1} parent=1 // pred_region
      %284 = dma.done [#allocation4], 256
    $region33: #{tpu_custom_call.1} parent=1 // pred_fallthru
      _
    // Predicated region
    $region34: #{tpu_custom_call.1} parent=1 // pred_check
      _
    $region35: #{tpu_custom_call.1} parent=1 // pred_check_branch
      %286 = sbr.rel (0) target = $region37
    $region36: #{tpu_custom_call.1} parent=1 // pred_region
      %287 = dma.done [#allocation9], 16
    $region37: #{tpu_custom_call.1} parent=1 // pred_fallthru
      _
    // Predicated region
    $region38: #{tpu_custom_call.1} parent=1 // pred_check
      _
    $region39: #{tpu_custom_call.1} parent=1 // pred_check_branch
      %289 = sbr.rel (0) target = $region41
    $region40: #{tpu_custom_call.1} parent=1 // pred_region
      %290 = dma.done [#allocation9], 16
    $region41: #{tpu_custom_call.1} parent=1 // pred_fallthru
      _
    %291 = vsyncpa [#allocation3], 1
    %292 = vsyncpa [#allocation6], 1
    %293 = vsyncpa [#allocation4], 1
    %294 = vsyncpa [#allocation9], 1

</llo_original>
